<compile_context>
chip_gen: v5e
topology: v5e:2x2
jax: 0.10.0
libtpu: 0.0.40
codegen_flags: <defaults>
</compile_context>

<pallas_src>
import functools

import jax
import jax.numpy as jnp
from jax.experimental import pallas as pl
from jax.experimental.pallas import tpu as pltpu


def _mae_partial_kernel(logits_ref, labels_ref, out_ref, *, n_rows, tile_n):
    """Writes the f32 partial sum of |logits - onehot(labels)| for one row tile."""
    x = logits_ref[...]                       # (tile_n, C), native dtype (f32/bf16)
    labels = labels_ref[...]                  # (tile_n, 1) int32

    # one-hot test without materializing the one-hot tensor.
    col = jax.lax.broadcasted_iota(jnp.int32, x.shape, dimension=1)
    is_hot = col == labels                    # (tile_n, 1) broadcasts to (tile_n, C)

    one = jnp.asarray(1, dtype=x.dtype)
    err = jnp.where(is_hot, jnp.abs(x - one), jnp.abs(x))   # native dtype

    # Mask rows beyond N (padding of the last partial tile).
    row = jax.lax.broadcasted_iota(jnp.int32, x.shape, dimension=0)
    global_row = pl.program_id(0) * tile_n + row
    err = jnp.where(global_row < n_rows, err, jnp.zeros_like(err))

    # Accumulate the reduction in f32 regardless of input dtype.
    partial = jnp.sum(err.astype(jnp.float32))

    # Lane-dense (1, 8, 128) output block, scalar splat; wrapper reads [i, 0, 0].
    out_ref[...] = jnp.broadcast_to(partial, out_ref.shape).astype(jnp.float32)


def mean_absolute_error(logits, labels, *, tile_n=None,
                        target_tile_bytes=4 * 1024 * 1024):
    """logits: (N, C) float, labels: (N,) int -> scalar float32."""
    n, c = logits.shape
    labels2 = labels.reshape(n, 1).astype(jnp.int32)

    itemsize = jnp.dtype(logits.dtype).itemsize
    if tile_n is None:
        # Rows per tile targeting ~4 MiB of logits per buffer (fits comfortably
        # in the 32 MiB scoped VMEM once double-buffered, incl. v7x's 64 MiB).
        tile_n = (target_tile_bytes // max(1, c * itemsize)) // 8 * 8
        tile_n = max(8, min(tile_n, 4096))
    n_pad8 = ((n + 7) // 8) * 8
    tile_n = max(8, min(tile_n, n_pad8))      # keep a multiple of 8
    num_tiles = pl.cdiv(n, tile_n)

    kernel = functools.partial(_mae_partial_kernel, n_rows=n, tile_n=tile_n)

    cost = pl.CostEstimate(
        flops=3 * n * c,                       # sub + abs + add (rough)
        transcendentals=0,
        bytes_accessed=n * c * itemsize + n * 4 + num_tiles * 8 * 128 * 4,
    )

    partials = pl.pallas_call(
        kernel,
        out_shape=jax.ShapeDtypeStruct((num_tiles, 8, 128), jnp.float32),
        grid=(num_tiles,),
        in_specs=[
            pl.BlockSpec((tile_n, c), lambda i: (i, 0)),    # logits row-tile
            pl.BlockSpec((tile_n, 1), lambda i: (i, 0)),    # labels row-tile
        ],
        out_specs=pl.BlockSpec((1, 8, 128), lambda i: (i, 0, 0)),
        compiler_params=pltpu.CompilerParams(
            dimension_semantics=("parallel",),              # no carried state
            vmem_limit_bytes=32 * 1024 * 1024,
        ),
        cost_estimate=cost,
    )(logits, labels2)

    total = jnp.sum(partials[:, 0, 0])
    return (total / (n * c)).astype(jnp.float32)


def _reference(logits, labels):
    n, c = logits.shape
    one_hot = jax.nn.one_hot(labels, c, dtype=jnp.float32)
    x = logits.astype(jnp.float32)
    return jnp.mean(jnp.mean(jnp.abs(x - one_hot), axis=1), axis=0)


if __name__ == "__main__":
    key = jax.random.PRNGKey(0)
    k1, k2, k3, k4 = jax.random.split(key, 4)

    # Small, single-tile case (matches the module's simple classification use).
    N, C = 8, 32
    logits = jax.random.normal(k1, (N, C), dtype=jnp.float32)
    labels = jax.random.randint(k2, (N,), 0, C, dtype=jnp.int32)

    out = mean_absolute_error(logits, labels)
    jax.block_until_ready(out)
    ref = _reference(logits, labels)
    assert jnp.allclose(out, ref, rtol=1e-5, atol=1e-5), (out, ref)

    # Multi-tile case with a partial last tile (exercises grid + row masking).
    N2, C2 = 50, 96
    logits2 = jax.random.normal(k3, (N2, C2), dtype=jnp.float32)
    labels2 = jax.random.randint(k4, (N2,), 0, C2, dtype=jnp.int32)

    out2 = mean_absolute_error(logits2, labels2, tile_n=16)   # 4 tiles, last partial
    jax.block_until_ready(out2)
    ref2 = _reference(logits2, labels2)
    assert jnp.allclose(out2, ref2, rtol=1e-5, atol=1e-5), (out2, ref2)

    # bf16 path: data stays bf16 end-to-end, only the reduction is f32.
    logits_bf16 = logits2.astype(jnp.bfloat16)
    out3 = mean_absolute_error(logits_bf16, labels2, tile_n=16)
    jax.block_until_ready(out3)
    ref3 = _reference(logits_bf16, labels2)
    assert jnp.allclose(out3, ref3, rtol=5e-2, atol=5e-2), (out3, ref3)

    print("KERNEL_OK")
</pallas_src>

<mosaic_0001>
module attributes {stable_mosaic.version = 11 : i64} {
  func.func @_mae_partial_kernel(%arg0: i32, %arg1: memref<8x32xf32, #tpu.memory_space<vmem>>, %arg2: memref<8x1xi32, #tpu.memory_space<vmem>>, %arg3: memref<1x8x128xf32, #tpu.memory_space<vmem>>) attributes {dimension_semantics = [#tpu.dimension_semantics<parallel>], iteration_bounds = array<i64: 1>, scalar_prefetch = 0 : i64, scratch_operands = 0 : i64, tpu.core_type = #tpu.core_type<tc>, window_params = [{transform_indices = @transform_0, window_bounds = array<i64: 8, 32>}, {transform_indices = @transform_1, window_bounds = array<i64: 8, 1>}, {transform_indices = @transform_2, window_bounds = array<i64: 1, 8, 128>}]} {
    %c0 = arith.constant 0 : index
    %c0_0 = arith.constant 0 : index
    %0 = vector.load %arg1[%c0, %c0_0] : memref<8x32xf32, #tpu.memory_space<vmem>>, vector<8x32xf32>
    %c0_1 = arith.constant 0 : index
    %c0_2 = arith.constant 0 : index
    %1 = vector.load %arg2[%c0_1, %c0_2] : memref<8x1xi32, #tpu.memory_space<vmem>>, vector<8x1xi32>
    %2 = tpu.iota {dimensions = array<i32: 1>} : vector<8x32xi32>
    %3 = vector.broadcast %1 : vector<8x1xi32> to vector<8x32xi32>
    %4 = arith.cmpi eq, %2, %3 : vector<8x32xi32>
    %cst = arith.constant 1.000000e+00 : f32
    %5 = vector.broadcast %cst : f32 to vector<8x32xf32>
    %6 = arith.subf %0, %5 : vector<8x32xf32>
    %7 = math.absf %6 : vector<8x32xf32>
    %8 = math.absf %0 : vector<8x32xf32>
    %9 = arith.select %4, %7, %8 : vector<8x32xi1>, vector<8x32xf32>
    %10 = tpu.iota {dimensions = array<i32: 0>} : vector<8x32xi32>
    %c8_i32 = arith.constant 8 : i32
    %11 = arith.muli %arg0, %c8_i32 : i32
    %12 = vector.broadcast %11 : i32 to vector<8x32xi32>
    %13 = arith.addi %12, %10 : vector<8x32xi32>
    %c8_i32_3 = arith.constant 8 : i32
    %14 = vector.broadcast %c8_i32_3 : i32 to vector<8x32xi32>
    %15 = arith.cmpi slt, %13, %14 : vector<8x32xi32>
    %cst_4 = arith.constant 0.000000e+00 : f32
    %16 = vector.broadcast %cst_4 : f32 to vector<8x32xf32>
    %17 = arith.select %15, %9, %16 : vector<8x32xi1>, vector<8x32xf32>
    %18 = vector.shape_cast %17 : vector<8x32xf32> to vector<1x8x32xf32>
    %cst_5 = arith.constant dense<0.000000e+00> : vector<1xf32>
    %19 = vector.multi_reduction <add>, %18, %cst_5 [1, 2] : vector<1x8x32xf32> to vector<1xf32>
    %20 = vector.shape_cast %19 : vector<1xf32> to vector<1x1x1xf32>
    %21 = vector.extract %20[0, 0, 0] : f32 from vector<1x1x1xf32>
    %22 = vector.broadcast %21 : f32 to vector<1x8x128xf32>
    %c0_6 = arith.constant 0 : index
    %c0_7 = arith.constant 0 : index
    %c0_8 = arith.constant 0 : index
    %23 = vector.load %arg3[%c0_6, %c0_7, %c0_8] : memref<1x8x128xf32, #tpu.memory_space<vmem>>, vector<1x8x128xf32>
    tpu.vector_store %arg3[%c0_6, %c0_7, %c0_8], %22 {strides = array<i32>} : memref<1x8x128xf32, #tpu.memory_space<vmem>>, vector<1x8x128xf32>,
    return
  }
  func.func @transform_0(%arg0: i32) -> (i32, i32) {
    %c0_i32 = arith.constant 0 : i32
    %c0_i32_0 = arith.constant 0 : i32
    return %arg0, %c0_i32 : i32, i32
  }
  func.func @transform_1(%arg0: i32) -> (i32, i32) {
    %c0_i32 = arith.constant 0 : i32
    %c0_i32_0 = arith.constant 0 : i32
    return %arg0, %c0_i32 : i32, i32
  }
  func.func @transform_2(%arg0: i32) -> (i32, i32, i32) {
    %c0_i32 = arith.constant 0 : i32
    %c0_i32_0 = arith.constant 0 : i32
    %c0_i32_1 = arith.constant 0 : i32
    return %arg0, %c0_i32, %c0_i32_0 : i32, i32, i32
  }
}

</mosaic_0001>

<llo_original>
// kernel: tpu_custom_call.1
$region0: #{tpu_custom_call.1}
  #allocation0 [shape = 'u32[]', space=smem, size = 0x4, offset = 0x4, fixed_abs, tag = 'smem constant byte address 0x4 - core index']
  #allocation1 [shape = 'u32[72,128]{1,0:T(1,128)}', space=vmem, size = 0x9000, scoped, tag = 'internal scratch']
  %s0 = inlined_call_operand.vmem [shape: f32[8,32], index: 0, kind: input, shape index: {}]
  %s1 = inlined_call_operand.vmem [shape: s32[8,1], index: 1, kind: input, shape index: {}]
  %s2 = inlined_call_operand.hbm [shape: f32[1,8,128], index: 2, kind: output, shape index: {}]
  %s3 = sld [smem:[#allocation0]]
  $region18: #{tpu_custom_call.1} parent=0
    _
  %s5 = ssub.s32 1, %s3
  %s6 = scalar_select 0, %s5, %s3
  $region1: #{tpu_custom_call.1} parent=0
    #allocation2 [shape = 'u8[4096]{0}', space=vmem, size = 0x1000, scoped, tag = 'output window, operand 0, single buffered']
    #allocation3 [shape = 's32[1]{0}', space=sflag, size = 0x4, scoped, tag = 'scoped memory for tpu_custom_call.1']
    %7 = vsyncpa [#allocation3], 0
    // Predicated region
    $region2: #{tpu_custom_call.1} parent=1 // pred_check
      _
    $region3: #{tpu_custom_call.1} parent=1 // pred_check_branch
      %9 = sbr.rel (0) target = $region5
    $region4: #{tpu_custom_call.1} parent=1 // pred_region
      _
    $region5: #{tpu_custom_call.1} parent=1 // pred_fallthru
      _
    // Predicated region
    $region6: #{tpu_custom_call.1} parent=1 // pred_check
      _
    $region7: #{tpu_custom_call.1} parent=1 // pred_check_branch
      %11 = sbr.rel (0) target = $region9
    $region8: #{tpu_custom_call.1} parent=1 // pred_region
      _
    $region9: #{tpu_custom_call.1} parent=1 // pred_fallthru
      _
    %v12 = vld [vmem:[%s0] sm:$0xff]
    %v13 = vld [vmem:[%s1] sm:$0xff]
    %v14 = vlaneseq
    %v15 = vand.u32 %v14, 127
    %16 = vset.pattern.permute.xlu0 0
    %17 = vperm.xlu0 %16, %v13
    %v18 = vpop.permute.xlu0 %17
    %vm19 = vcmp.eq.s32.totalorder %v15, %v18
    %v20 = vsub.f32 %v12, 1.0
    %v21 = vand.u32 2147483647, %v20
    %v22 = vand.u32 2147483647, %v12
    %v23 = vsel %vm19, %v21, %v22
    %v24 = vlaneseq
    %v25 = vshrl.u32 %v24, 7
    %s26 = smul.u32 0, 8
    %v27 = vstv %s26
    %v28 = vadd.s32 %v27, %v25
    %vm29 = vcmp.lt.s32.totalorder %v28, 8
    %v30 = vsel %vm29, %v23, 0.0
    %vm31 = vcmask 261120
    %v32 = vsel %vm31, %v30, 0.0
    %33 = vadd.xlane.f32.xlu0 %v32
    %v34 = vpop.xlane.xlu0 %33
    %v35 = vrot.slane %v34, 4
    %v36 = vadd.f32 %v34, %v35
    %v37 = vrot.slane %v36, 2
    %v38 = vadd.f32 %v36, %v37
    %v39 = vrot.slane %v38, 1
    %v40 = vadd.f32 %v38, %v39
    %s41 = vtos %v40
    %v42 = vstv %s41
    %43 = vst [vmem:[#allocation2] sm:$0xff] %v42
    // Predicated region
    $region10: #{tpu_custom_call.1} parent=1 // pred_check
      _
    $region11: #{tpu_custom_call.1} parent=1 // pred_check_branch
      %45 = sbr.rel (0) target = $region13
    $region12: #{tpu_custom_call.1} parent=1 // pred_region
      %47 = vsyncadd [#allocation3], 0
      %s49 = sshll.u32 [#allocation2], 4
      %s50 = int_to_ptr.vmem [resolvable:$true] %s49
      %s51 = sshll.u32 %s2, 4
      %s52 = int_to_ptr.hbm [resolvable:$true] %s51
      %54 = dma.vmem_to_hbm [thread:$0]  %s50, 128, %s52, [#allocation3]
    $region13: #{tpu_custom_call.1} parent=1 // pred_fallthru
      _
    // Predicated region
    $region14: #{tpu_custom_call.1} parent=1 // pred_check
      _
    $region15: #{tpu_custom_call.1} parent=1 // pred_check_branch
      %56 = sbr.rel (0) target = $region17
    $region16: #{tpu_custom_call.1} parent=1 // pred_region
      %58 = dma.done [#allocation3], 128
    $region17: #{tpu_custom_call.1} parent=1 // pred_fallthru
      _
    %59 = vsyncpa [#allocation3], 1

</llo_original>
